<compile_context>
chip_gen: v5e
topology: v5e:2x2
jax: 0.10.0
libtpu: 0.0.40
codegen_flags: <defaults>
</compile_context>

<pallas_src>
import functools
import math

import jax
import jax.numpy as jnp
from jax.experimental import pallas as pl
from jax.experimental.pallas import tpu as pltpu


def _layer_norm(z, gamma, beta, eps=1e-5):
    mu = jnp.mean(z, axis=-1, keepdims=True)
    var = jnp.mean((z - mu) ** 2, axis=-1, keepdims=True)
    return (z - mu) * jax.lax.rsqrt(var + eps) * gamma + beta


def encoder_layer_kernel(x_ref, x0_ref, mask_ref,
                         wqkv_ref, wo_ref,
                         w1_ref, b1_ref, w2_ref, b2_ref,
                         ln0_g_ref, ln0_b_ref, ln1_g_ref, ln1_b_ref,
                         o_ref, *, batch, seq, n_head, d_qkv, compute_dtype):
    f32 = jnp.float32
    hdk = n_head * d_qkv

    x = x_ref[...].astype(f32)        # (B*S, D)
    x0 = x0_ref[...].astype(f32)      # (B*S, D)

    # Additive key mask, computed once (hoisted out of any head loop).
    bias = jnp.where(mask_ref[...] > 0.0, 0.0, -1e9)          # (B, S)

    # ---- fused QKV projection: one (B*S, D) x (D, 3*H*DK) matmul ---------
    # 1/sqrt(d_qkv) is already folded into the Q columns of wqkv.
    qkv = jnp.dot(x.astype(compute_dtype), wqkv_ref[...],
                  preferred_element_type=f32)                  # (B*S, 3*H*DK)

    ctx_rows = []
    for b in range(batch):            # B is small & static -> unrolled
        rows = qkv[b * seq:(b + 1) * seq]                      # (S, 3*H*DK)

        # Per-head logits stacked along sublanes -> single masked softmax.
        logits = jnp.concatenate(
            [jnp.dot(rows[:, h * d_qkv:(h + 1) * d_qkv],
                     rows[:, hdk + h * d_qkv: hdk + (h + 1) * d_qkv].T,
                     preferred_element_type=f32)
             for h in range(n_head)], axis=0)                  # (H*S, S)
        logits = logits + bias[b:b + 1, :]                     # masked_fill
        p = jax.nn.softmax(logits, axis=-1)                    # one softmax
        # TODO(synk): attention dropout omitted (eval-mode semantics).

        # Per-head contexts stacked along lanes -> (S, H*DK), lane-dense.
        ctx_b = jnp.concatenate(
            [jnp.dot(p[h * seq:(h + 1) * seq],
                     rows[:, 2 * hdk + h * d_qkv: 2 * hdk + (h + 1) * d_qkv],
                     preferred_element_type=f32)
             for h in range(n_head)], axis=1)                  # (S, H*DK)
        ctx_rows.append(ctx_b)
    ctx = jnp.concatenate(ctx_rows, axis=0)                    # (B*S, H*DK)

    # ---- fused output projection: one (B*S, H*DK) x (H*DK, D) matmul -----
    attn = jnp.dot(ctx.astype(compute_dtype), wo_ref[...],
                   preferred_element_type=f32)                 # (B*S, D)

    h1 = _layer_norm(x + x0 + attn, ln0_g_ref[...], ln0_b_ref[...])

    # ---- FFN: Linear -> ReLU -> Linear ------------------------------------
    hidden = jnp.maximum(
        jnp.dot(h1.astype(compute_dtype), w1_ref[...],
                preferred_element_type=f32) + b1_ref[...], 0.0)
    # TODO(synk): FFN dropout omitted (eval-mode semantics).
    ff = jnp.dot(hidden.astype(compute_dtype), w2_ref[...],
                 preferred_element_type=f32) + b2_ref[...]

    out = _layer_norm(h1 + x0 + ff, ln1_g_ref[...], ln1_b_ref[...])
    o_ref[...] = out.astype(o_ref.dtype)


def fuse_layer_params(p, *, d_qkv, compute_dtype=jnp.float32):
    """Fold per-head weights into single wide matmul operands."""
    H, D, DK = p["wq"].shape
    scale = 1.0 / math.sqrt(d_qkv)

    def heads_to_cols(w):             # (H, D, DK) -> (D, H*DK), head-major cols
        return jnp.transpose(w, (1, 0, 2)).reshape(D, H * DK)

    wqkv = jnp.concatenate(
        [heads_to_cols(p["wq"]) * scale,      # scale folded into Q
         heads_to_cols(p["wk"]),
         heads_to_cols(p["wv"])], axis=1).astype(compute_dtype)   # (D, 3*H*DK)
    wo = p["wo"].reshape(H * DK, D).astype(compute_dtype)         # (H*DK, D)
    return {
        "wqkv": wqkv, "wo": wo,
        "w1": p["w1"].astype(compute_dtype), "b1": p["b1"],
        "w2": p["w2"].astype(compute_dtype), "b2": p["b2"],
        "ln0_g": p["ln0_g"], "ln0_b": p["ln0_b"],
        "ln1_g": p["ln1_g"], "ln1_b": p["ln1_b"],
    }


def encoder_layer(x2d, x02d, mask_f, fp, *, batch, seq, n_head, d_qkv,
                  compute_dtype):
    BS, D = x2d.shape
    kernel = functools.partial(encoder_layer_kernel, batch=batch, seq=seq,
                               n_head=n_head, d_qkv=d_qkv,
                               compute_dtype=compute_dtype)
    vmem = pl.BlockSpec(memory_space=pltpu.MemorySpace.VMEM)   # whole array
    return pl.pallas_call(
        kernel,
        out_shape=jax.ShapeDtypeStruct((BS, D), x2d.dtype),
        in_specs=[vmem] * 13,
        out_specs=vmem,
    )(x2d, x02d, mask_f,
      fp["wqkv"], fp["wo"], fp["w1"], fp["b1"], fp["w2"], fp["b2"],
      fp["ln0_g"], fp["ln0_b"], fp["ln1_g"], fp["ln1_b"])


def transformer_encoder(x, mask, fused_layers, *, n_head, d_qkv,
                        compute_dtype=jnp.float32):
    """pos_embed='none', mode='add', eval mode."""
    B, S, D = x.shape
    x2d = x.reshape(B * S, D)          # sublane/lane-dense single block
    x0 = x2d                           # x0 = add_timing(x) = x
    mask_f = mask.astype(jnp.float32)
    h = x2d
    for fp in fused_layers:
        h = encoder_layer(h, x0, mask_f, fp, batch=B, seq=S,
                          n_head=n_head, d_qkv=d_qkv,
                          compute_dtype=compute_dtype)
    return h.reshape(B, S, D)


# --------------------------- pure-JAX reference ----------------------------
def encoder_layer_ref(x, x0, mask, p, *, n_head, d_qkv):
    q = jnp.einsum("bld,hdk->bhlk", x, p["wq"])
    k = jnp.einsum("bld,hdk->bhlk", x, p["wk"])
    v = jnp.einsum("bld,hdk->bhlk", x, p["wv"])
    logits = jnp.einsum("bhlk,bhmk->bhlm", q, k) / math.sqrt(d_qkv)
    logits = jnp.where(mask[:, None, None, :] > 0, logits, -1e9)
    attn = jnp.einsum("bhlm,bhmk->bhlk", jax.nn.softmax(logits, -1), v)
    attn = jnp.einsum("bhlk,hkd->bld", attn, p["wo"])

    def ln(z, g, b):
        mu = jnp.mean(z, -1, keepdims=True)
        var = jnp.mean((z - mu) ** 2, -1, keepdims=True)
        return (z - mu) / jnp.sqrt(var + 1e-5) * g + b

    h1 = ln(x + x0 + attn, p["ln0_g"][0], p["ln0_b"][0])
    ff = jnp.maximum(h1 @ p["w1"] + p["b1"][0], 0.0) @ p["w2"] + p["b2"][0]
    return ln(h1 + x0 + ff, p["ln1_g"][0], p["ln1_b"][0])


def transformer_encoder_ref(x, mask, raw_layers, *, n_head, d_qkv):
    x0 = x
    h = x
    for p in raw_layers:
        h = encoder_layer_ref(h, x0, mask, p, n_head=n_head, d_qkv=d_qkv)
    return h


# --------------------------------- main -------------------------------------
if __name__ == "__main__":
    # Small shapes consistent with the module's forward.
    B, S, D = 2, 8, 32           # batch, seq, d_model
    H, DK, DFF = 4, 8, 64        # n_head, d_qkv, d_ff
    N_LAYERS = 2

    key = jax.random.PRNGKey(0)

    def xavier(k, shape, fi, fo):
        return jax.random.normal(k, shape, jnp.float32) * math.sqrt(2.0 / (fi + fo))

    def make_layer(k):
        ks = jax.random.split(k, 8)
        return {
            "wq": xavier(ks[0], (H, D, DK), D, DK),
            "wk": xavier(ks[1], (H, D, DK), D, DK),
            "wv": xavier(ks[2], (H, D, DK), D, DK),
            "wo": xavier(ks[3], (H, DK, D), DK, D),
            "w1": xavier(ks[4], (D, DFF), D, DFF),
            "b1": jax.random.normal(ks[5], (1, DFF), jnp.float32) * 0.01,
            "w2": xavier(ks[6], (DFF, D), DFF, D),
            "b2": jax.random.normal(ks[7], (1, D), jnp.float32) * 0.01,
            "ln0_g": jnp.ones((1, D), jnp.float32),
            "ln0_b": jnp.zeros((1, D), jnp.float32),
            "ln1_g": jnp.ones((1, D), jnp.float32),
            "ln1_b": jnp.zeros((1, D), jnp.float32),
        }

    key, kx, kx0 = jax.random.split(key, 3)
    layer_keys = jax.random.split(key, N_LAYERS)
    raw_layers = [make_layer(k) for k in layer_keys]

    x = jax.random.normal(kx, (B, S, D), jnp.float32)
    lens = jnp.array([S, 5])
    mask = (jnp.arange(S)[None, :] < lens[:, None]).astype(jnp.float32)  # (B, S)

    ref = transformer_encoder_ref(x, mask, raw_layers, n_head=H, d_qkv=DK)

    # ---- f32 kernel (tight tolerance) ----
    fused_f32 = [fuse_layer_params(p, d_qkv=DK, compute_dtype=jnp.float32)
                 for p in raw_layers]
    out_f32 = transformer_encoder(x, mask, fused_f32, n_head=H, d_qkv=DK,
                                  compute_dtype=jnp.float32)
    out_f32 = jax.block_until_ready(out_f32)
    assert out_f32.shape == (B, S, D)
    err = jnp.max(jnp.abs(out_f32 - ref))
    assert jnp.allclose(out_f32, ref, atol=2e-3, rtol=2e-3), f"f32 max err {err}"

    # ---- bf16 matmul-input kernel (v6e/v7x MXU path, loose tolerance) ----
    fused_bf16 = [fuse_layer_params(p, d_qkv=DK, compute_dtype=jnp.bfloat16)
                  for p in raw_layers]
    out_bf16 = transformer_encoder(x, mask, fused_bf16, n_head=H, d_qkv=DK,
                                   compute_dtype=jnp.bfloat16)
    out_bf16 = jax.block_until_ready(out_bf16)
    err_bf16 = jnp.max(jnp.abs(out_bf16 - ref))
    assert jnp.allclose(out_bf16, ref, atol=5e-2, rtol=5e-2), \
        f"bf16 max err {err_bf16}"

    print("KERNEL_OK")
</pallas_src>

<mosaic_0001>
module attributes {stable_mosaic.version = 11 : i64} {
  func.func @encoder_layer_kernel(%arg0: memref<16x32xf32, #tpu.memory_space<vmem>>, %arg1: memref<16x32xf32, #tpu.memory_space<vmem>>, %arg2: memref<2x8xf32, #tpu.memory_space<vmem>>, %arg3: memref<32x96xf32, #tpu.memory_space<vmem>>, %arg4: memref<32x32xf32, #tpu.memory_space<vmem>>, %arg5: memref<32x64xf32, #tpu.memory_space<vmem>>, %arg6: memref<1x64xf32, #tpu.memory_space<vmem>>, %arg7: memref<64x32xf32, #tpu.memory_space<vmem>>, %arg8: memref<1x32xf32, #tpu.memory_space<vmem>>, %arg9: memref<1x32xf32, #tpu.memory_space<vmem>>, %arg10: memref<1x32xf32, #tpu.memory_space<vmem>>, %arg11: memref<1x32xf32, #tpu.memory_space<vmem>>, %arg12: memref<1x32xf32, #tpu.memory_space<vmem>>, %arg13: memref<16x32xf32, #tpu.memory_space<vmem>>) attributes {dimension_semantics = [], scalar_prefetch = 0 : i64, scratch_operands = 0 : i64, tpu.core_type = #tpu.core_type<tc>} {
    %c0 = arith.constant 0 : index
    %c0_0 = arith.constant 0 : index
    %0 = vector.load %arg0[%c0, %c0_0] : memref<16x32xf32, #tpu.memory_space<vmem>>, vector<16x32xf32>
    %c0_1 = arith.constant 0 : index
    %c0_2 = arith.constant 0 : index
    %1 = vector.load %arg1[%c0_1, %c0_2] : memref<16x32xf32, #tpu.memory_space<vmem>>, vector<16x32xf32>
    %c0_3 = arith.constant 0 : index
    %c0_4 = arith.constant 0 : index
    %2 = vector.load %arg2[%c0_3, %c0_4] : memref<2x8xf32, #tpu.memory_space<vmem>>, vector<2x8xf32>
    %cst = arith.constant 0.000000e+00 : f32
    %3 = vector.broadcast %cst : f32 to vector<2x8xf32>
    %4 = arith.cmpf ogt, %2, %3 : vector<2x8xf32>
    %cst_5 = arith.constant 0.000000e+00 : f32
    %cst_6 = arith.constant -1.000000e+09 : f32
    %5 = vector.broadcast %cst_5 : f32 to vector<2x8xf32>
    %6 = vector.broadcast %cst_6 : f32 to vector<2x8xf32>
    %7 = arith.select %4, %5, %6 : vector<2x8xi1>, vector<2x8xf32>
    %c0_7 = arith.constant 0 : index
    %c0_8 = arith.constant 0 : index
    %8 = vector.load %arg3[%c0_7, %c0_8] : memref<32x96xf32, #tpu.memory_space<vmem>>, vector<32x96xf32>
    %cst_9 = arith.constant dense<0.000000e+00> : vector<16x96xf32>
    %9 = tpu.matmul %0, %8, %cst_9 {dimension_numbers = #tpu.dot_dimension_numbers<[1], [0], [0], [1], [0, 0, 1, 1], [], []>} : vector<16x32xf32>, vector<32x96xf32>, vector<16x96xf32> -> vector<16x96xf32>
    %10 = vector.extract_strided_slice %9 {offsets = [0, 0], sizes = [8, 96], strides = [1, 1]} : vector<16x96xf32> to vector<8x96xf32>
    %11 = vector.extract_strided_slice %10 {offsets = [0, 0], sizes = [8, 8], strides = [1, 1]} : vector<8x96xf32> to vector<8x8xf32>
    %12 = vector.extract_strided_slice %10 {offsets = [0, 32], sizes = [8, 8], strides = [1, 1]} : vector<8x96xf32> to vector<8x8xf32>
    %13 = tpu.transpose %12, [1, 0] : vector<8x8xf32> -> vector<8x8xf32>
    %cst_10 = arith.constant dense<0.000000e+00> : vector<8x8xf32>
    %14 = tpu.matmul %11, %13, %cst_10 {dimension_numbers = #tpu.dot_dimension_numbers<[1], [0], [0], [1], [0, 0, 1, 1], [], []>} : vector<8x8xf32>, vector<8x8xf32>, vector<8x8xf32> -> vector<8x8xf32>
    %15 = vector.extract_strided_slice %10 {offsets = [0, 8], sizes = [8, 8], strides = [1, 1]} : vector<8x96xf32> to vector<8x8xf32>
    %16 = vector.extract_strided_slice %10 {offsets = [0, 40], sizes = [8, 8], strides = [1, 1]} : vector<8x96xf32> to vector<8x8xf32>
    %17 = tpu.transpose %16, [1, 0] : vector<8x8xf32> -> vector<8x8xf32>
    %cst_11 = arith.constant dense<0.000000e+00> : vector<8x8xf32>
    %18 = tpu.matmul %15, %17, %cst_11 {dimension_numbers = #tpu.dot_dimension_numbers<[1], [0], [0], [1], [0, 0, 1, 1], [], []>} : vector<8x8xf32>, vector<8x8xf32>, vector<8x8xf32> -> vector<8x8xf32>
    %19 = vector.extract_strided_slice %10 {offsets = [0, 16], sizes = [8, 8], strides = [1, 1]} : vector<8x96xf32> to vector<8x8xf32>
    %20 = vector.extract_strided_slice %10 {offsets = [0, 48], sizes = [8, 8], strides = [1, 1]} : vector<8x96xf32> to vector<8x8xf32>
    %21 = tpu.transpose %20, [1, 0] : vector<8x8xf32> -> vector<8x8xf32>
    %cst_12 = arith.constant dense<0.000000e+00> : vector<8x8xf32>
    %22 = tpu.matmul %19, %21, %cst_12 {dimension_numbers = #tpu.dot_dimension_numbers<[1], [0], [0], [1], [0, 0, 1, 1], [], []>} : vector<8x8xf32>, vector<8x8xf32>, vector<8x8xf32> -> vector<8x8xf32>
    %23 = vector.extract_strided_slice %10 {offsets = [0, 24], sizes = [8, 8], strides = [1, 1]} : vector<8x96xf32> to vector<8x8xf32>
    %24 = vector.extract_strided_slice %10 {offsets = [0, 56], sizes = [8, 8], strides = [1, 1]} : vector<8x96xf32> to vector<8x8xf32>
    %25 = tpu.transpose %24, [1, 0] : vector<8x8xf32> -> vector<8x8xf32>
    %cst_13 = arith.constant dense<0.000000e+00> : vector<8x8xf32>
    %26 = tpu.matmul %23, %25, %cst_13 {dimension_numbers = #tpu.dot_dimension_numbers<[1], [0], [0], [1], [0, 0, 1, 1], [], []>} : vector<8x8xf32>, vector<8x8xf32>, vector<8x8xf32> -> vector<8x8xf32>
    %27 = tpu.concatenate %14, %18, %22, %26 in 0 : vector<8x8xf32>, vector<8x8xf32>, vector<8x8xf32>, vector<8x8xf32> -> vector<32x8xf32>
    %28 = vector.extract_strided_slice %7 {offsets = [0, 0], sizes = [1, 8], strides = [1, 1]} : vector<2x8xf32> to vector<1x8xf32>
    %29 = vector.broadcast %28 : vector<1x8xf32> to vector<32x8xf32>
    %30 = arith.addf %27, %29 : vector<32x8xf32>
    %cst_14 = arith.constant dense<0xFF800000> : vector<32xf32>
    %31 = vector.multi_reduction <maximumf>, %30, %cst_14 [1] : vector<32x8xf32> to vector<32xf32>
    %cst_15 = arith.constant 0xFF800000 : f32
    %32 = vector.broadcast %cst_15 : f32 to vector<32xf32>
    %33 = arith.maximumf %32, %31 : vector<32xf32>
    %34 = vector.shape_cast %33 : vector<32xf32> to vector<32x1xf32>
    %35 = vector.broadcast %34 : vector<32x1xf32> to vector<32x8xf32>
    %36 = arith.subf %30, %35 : vector<32x8xf32>
    %37 = math.exp %36 : vector<32x8xf32>
    %cst_16 = arith.constant dense<0.000000e+00> : vector<32xf32>
    %38 = vector.multi_reduction <add>, %37, %cst_16 [1] : vector<32x8xf32> to vector<32xf32>
    %39 = vector.shape_cast %38 : vector<32xf32> to vector<32x1xf32>
    %40 = vector.broadcast %39 : vector<32x1xf32> to vector<32x8xf32>
    %41 = arith.divf %37, %40 : vector<32x8xf32>
    %42 = vector.extract_strided_slice %41 {offsets = [0, 0], sizes = [8, 8], strides = [1, 1]} : vector<32x8xf32> to vector<8x8xf32>
    %43 = vector.extract_strided_slice %10 {offsets = [0, 64], sizes = [8, 8], strides = [1, 1]} : vector<8x96xf32> to vector<8x8xf32>
    %cst_17 = arith.constant dense<0.000000e+00> : vector<8x8xf32>
    %44 = tpu.matmul %42, %43, %cst_17 {dimension_numbers = #tpu.dot_dimension_numbers<[1], [0], [0], [1], [0, 0, 1, 1], [], []>} : vector<8x8xf32>, vector<8x8xf32>, vector<8x8xf32> -> vector<8x8xf32>
    %45 = vector.extract_strided_slice %41 {offsets = [8, 0], sizes = [8, 8], strides = [1, 1]} : vector<32x8xf32> to vector<8x8xf32>
    %46 = vector.extract_strided_slice %10 {offsets = [0, 72], sizes = [8, 8], strides = [1, 1]} : vector<8x96xf32> to vector<8x8xf32>
    %cst_18 = arith.constant dense<0.000000e+00> : vector<8x8xf32>
    %47 = tpu.matmul %45, %46, %cst_18 {dimension_numbers = #tpu.dot_dimension_numbers<[1], [0], [0], [1], [0, 0, 1, 1], [], []>} : vector<8x8xf32>, vector<8x8xf32>, vector<8x8xf32> -> vector<8x8xf32>
    %48 = vector.extract_strided_slice %41 {offsets = [16, 0], sizes = [8, 8], strides = [1, 1]} : vector<32x8xf32> to vector<8x8xf32>
    %49 = vector.extract_strided_slice %10 {offsets = [0, 80], sizes = [8, 8], strides = [1, 1]} : vector<8x96xf32> to vector<8x8xf32>
    %cst_19 = arith.constant dense<0.000000e+00> : vector<8x8xf32>
    %50 = tpu.matmul %48, %49, %cst_19 {dimension_numbers = #tpu.dot_dimension_numbers<[1], [0], [0], [1], [0, 0, 1, 1], [], []>} : vector<8x8xf32>, vector<8x8xf32>, vector<8x8xf32> -> vector<8x8xf32>
    %51 = vector.extract_strided_slice %41 {offsets = [24, 0], sizes = [8, 8], strides = [1, 1]} : vector<32x8xf32> to vector<8x8xf32>
    %52 = vector.extract_strided_slice %10 {offsets = [0, 88], sizes = [8, 8], strides = [1, 1]} : vector<8x96xf32> to vector<8x8xf32>
    %cst_20 = arith.constant dense<0.000000e+00> : vector<8x8xf32>
    %53 = tpu.matmul %51, %52, %cst_20 {dimension_numbers = #tpu.dot_dimension_numbers<[1], [0], [0], [1], [0, 0, 1, 1], [], []>} : vector<8x8xf32>, vector<8x8xf32>, vector<8x8xf32> -> vector<8x8xf32>
    %54 = tpu.concatenate %44, %47, %50, %53 in 1 : vector<8x8xf32>, vector<8x8xf32>, vector<8x8xf32>, vector<8x8xf32> -> vector<8x32xf32>
    %55 = vector.extract_strided_slice %9 {offsets = [8, 0], sizes = [8, 96], strides = [1, 1]} : vector<16x96xf32> to vector<8x96xf32>
    %56 = vector.extract_strided_slice %55 {offsets = [0, 0], sizes = [8, 8], strides = [1, 1]} : vector<8x96xf32> to vector<8x8xf32>
    %57 = vector.extract_strided_slice %55 {offsets = [0, 32], sizes = [8, 8], strides = [1, 1]} : vector<8x96xf32> to vector<8x8xf32>
    %58 = tpu.transpose %57, [1, 0] : vector<8x8xf32> -> vector<8x8xf32>
    %cst_21 = arith.constant dense<0.000000e+00> : vector<8x8xf32>
    %59 = tpu.matmul %56, %58, %cst_21 {dimension_numbers = #tpu.dot_dimension_numbers<[1], [0], [0], [1], [0, 0, 1, 1], [], []>} : vector<8x8xf32>, vector<8x8xf32>, vector<8x8xf32> -> vector<8x8xf32>
    %60 = vector.extract_strided_slice %55 {offsets = [0, 8], sizes = [8, 8], strides = [1, 1]} : vector<8x96xf32> to vector<8x8xf32>
    %61 = vector.extract_strided_slice %55 {offsets = [0, 40], sizes = [8, 8], strides = [1, 1]} : vector<8x96xf32> to vector<8x8xf32>
    %62 = tpu.transpose %61, [1, 0] : vector<8x8xf32> -> vector<8x8xf32>
    %cst_22 = arith.constant dense<0.000000e+00> : vector<8x8xf32>
    %63 = tpu.matmul %60, %62, %cst_22 {dimension_numbers = #tpu.dot_dimension_numbers<[1], [0], [0], [1], [0, 0, 1, 1], [], []>} : vector<8x8xf32>, vector<8x8xf32>, vector<8x8xf32> -> vector<8x8xf32>
    %64 = vector.extract_strided_slice %55 {offsets = [0, 16], sizes = [8, 8], strides = [1, 1]} : vector<8x96xf32> to vector<8x8xf32>
    %65 = vector.extract_strided_slice %55 {offsets = [0, 48], sizes = [8, 8], strides = [1, 1]} : vector<8x96xf32> to vector<8x8xf32>
    %66 = tpu.transpose %65, [1, 0] : vector<8x8xf32> -> vector<8x8xf32>
    %cst_23 = arith.constant dense<0.000000e+00> : vector<8x8xf32>
    %67 = tpu.matmul %64, %66, %cst_23 {dimension_numbers = #tpu.dot_dimension_numbers<[1], [0], [0], [1], [0, 0, 1, 1], [], []>} : vector<8x8xf32>, vector<8x8xf32>, vector<8x8xf32> -> vector<8x8xf32>
    %68 = vector.extract_strided_slice %55 {offsets = [0, 24], sizes = [8, 8], strides = [1, 1]} : vector<8x96xf32> to vector<8x8xf32>
    %69 = vector.extract_strided_slice %55 {offsets = [0, 56], sizes = [8, 8], strides = [1, 1]} : vector<8x96xf32> to vector<8x8xf32>
    %70 = tpu.transpose %69, [1, 0] : vector<8x8xf32> -> vector<8x8xf32>
    %cst_24 = arith.constant dense<0.000000e+00> : vector<8x8xf32>
    %71 = tpu.matmul %68, %70, %cst_24 {dimension_numbers = #tpu.dot_dimension_numbers<[1], [0], [0], [1], [0, 0, 1, 1], [], []>} : vector<8x8xf32>, vector<8x8xf32>, vector<8x8xf32> -> vector<8x8xf32>
    %72 = tpu.concatenate %59, %63, %67, %71 in 0 : vector<8x8xf32>, vector<8x8xf32>, vector<8x8xf32>, vector<8x8xf32> -> vector<32x8xf32>
    %73 = vector.extract_strided_slice %7 {offsets = [1, 0], sizes = [1, 8], strides = [1, 1]} : vector<2x8xf32> to vector<1x8xf32>
    %74 = vector.broadcast %73 : vector<1x8xf32> to vector<32x8xf32>
    %75 = arith.addf %72, %74 : vector<32x8xf32>
    %cst_25 = arith.constant dense<0xFF800000> : vector<32xf32>
    %76 = vector.multi_reduction <maximumf>, %75, %cst_25 [1] : vector<32x8xf32> to vector<32xf32>
    %cst_26 = arith.constant 0xFF800000 : f32
    %77 = vector.broadcast %cst_26 : f32 to vector<32xf32>
    %78 = arith.maximumf %77, %76 : vector<32xf32>
    %79 = vector.shape_cast %78 : vector<32xf32> to vector<32x1xf32>
    %80 = vector.broadcast %79 : vector<32x1xf32> to vector<32x8xf32>
    %81 = arith.subf %75, %80 : vector<32x8xf32>
    %82 = math.exp %81 : vector<32x8xf32>
    %cst_27 = arith.constant dense<0.000000e+00> : vector<32xf32>
    %83 = vector.multi_reduction <add>, %82, %cst_27 [1] : vector<32x8xf32> to vector<32xf32>
    %84 = vector.shape_cast %83 : vector<32xf32> to vector<32x1xf32>
    %85 = vector.broadcast %84 : vector<32x1xf32> to vector<32x8xf32>
    %86 = arith.divf %82, %85 : vector<32x8xf32>
    %87 = vector.extract_strided_slice %86 {offsets = [0, 0], sizes = [8, 8], strides = [1, 1]} : vector<32x8xf32> to vector<8x8xf32>
    %88 = vector.extract_strided_slice %55 {offsets = [0, 64], sizes = [8, 8], strides = [1, 1]} : vector<8x96xf32> to vector<8x8xf32>
    %cst_28 = arith.constant dense<0.000000e+00> : vector<8x8xf32>
    %89 = tpu.matmul %87, %88, %cst_28 {dimension_numbers = #tpu.dot_dimension_numbers<[1], [0], [0], [1], [0, 0, 1, 1], [], []>} : vector<8x8xf32>, vector<8x8xf32>, vector<8x8xf32> -> vector<8x8xf32>
    %90 = vector.extract_strided_slice %86 {offsets = [8, 0], sizes = [8, 8], strides = [1, 1]} : vector<32x8xf32> to vector<8x8xf32>
    %91 = vector.extract_strided_slice %55 {offsets = [0, 72], sizes = [8, 8], strides = [1, 1]} : vector<8x96xf32> to vector<8x8xf32>
    %cst_29 = arith.constant dense<0.000000e+00> : vector<8x8xf32>
    %92 = tpu.matmul %90, %91, %cst_29 {dimension_numbers = #tpu.dot_dimension_numbers<[1], [0], [0], [1], [0, 0, 1, 1], [], []>} : vector<8x8xf32>, vector<8x8xf32>, vector<8x8xf32> -> vector<8x8xf32>
    %93 = vector.extract_strided_slice %86 {offsets = [16, 0], sizes = [8, 8], strides = [1, 1]} : vector<32x8xf32> to vector<8x8xf32>
    %94 = vector.extract_strided_slice %55 {offsets = [0, 80], sizes = [8, 8], strides = [1, 1]} : vector<8x96xf32> to vector<8x8xf32>
    %cst_30 = arith.constant dense<0.000000e+00> : vector<8x8xf32>
    %95 = tpu.matmul %93, %94, %cst_30 {dimension_numbers = #tpu.dot_dimension_numbers<[1], [0], [0], [1], [0, 0, 1, 1], [], []>} : vector<8x8xf32>, vector<8x8xf32>, vector<8x8xf32> -> vector<8x8xf32>
    %96 = vector.extract_strided_slice %86 {offsets = [24, 0], sizes = [8, 8], strides = [1, 1]} : vector<32x8xf32> to vector<8x8xf32>
    %97 = vector.extract_strided_slice %55 {offsets = [0, 88], sizes = [8, 8], strides = [1, 1]} : vector<8x96xf32> to vector<8x8xf32>
    %cst_31 = arith.constant dense<0.000000e+00> : vector<8x8xf32>
    %98 = tpu.matmul %96, %97, %cst_31 {dimension_numbers = #tpu.dot_dimension_numbers<[1], [0], [0], [1], [0, 0, 1, 1], [], []>} : vector<8x8xf32>, vector<8x8xf32>, vector<8x8xf32> -> vector<8x8xf32>
    %99 = tpu.concatenate %89, %92, %95, %98 in 1 : vector<8x8xf32>, vector<8x8xf32>, vector<8x8xf32>, vector<8x8xf32> -> vector<8x32xf32>
    %100 = tpu.concatenate %54, %99 in 0 : vector<8x32xf32>, vector<8x32xf32> -> vector<16x32xf32>
    %c0_32 = arith.constant 0 : index
    %c0_33 = arith.constant 0 : index
    %101 = vector.load %arg4[%c0_32, %c0_33] : memref<32x32xf32, #tpu.memory_space<vmem>>, vector<32x32xf32>
    %cst_34 = arith.constant dense<0.000000e+00> : vector<16x32xf32>
    %102 = tpu.matmul %100, %101, %cst_34 {dimension_numbers = #tpu.dot_dimension_numbers<[1], [0], [0], [1], [0, 0, 1, 1], [], []>} : vector<16x32xf32>, vector<32x32xf32>, vector<16x32xf32> -> vector<16x32xf32>
    %103 = arith.addf %0, %1 : vector<16x32xf32>
    %104 = arith.addf %103, %102 : vector<16x32xf32>
    %c0_35 = arith.constant 0 : index
    %c0_36 = arith.constant 0 : index
    %105 = vector.load %arg9[%c0_35, %c0_36] : memref<1x32xf32, #tpu.memory_space<vmem>>, vector<1x32xf32>
    %c0_37 = arith.constant 0 : index
    %c0_38 = arith.constant 0 : index
    %106 = vector.load %arg10[%c0_37, %c0_38] : memref<1x32xf32, #tpu.memory_space<vmem>>, vector<1x32xf32>
    %cst_39 = arith.constant dense<0.000000e+00> : vector<16xf32>
    %107 = vector.multi_reduction <add>, %104, %cst_39 [1] : vector<16x32xf32> to vector<16xf32>
    %108 = vector.shape_cast %107 : vector<16xf32> to vector<16x1xf32>
    %cst_40 = arith.constant 3.200000e+01 : f32
    %109 = vector.broadcast %cst_40 : f32 to vector<16x1xf32>
    %110 = arith.divf %108, %109 : vector<16x1xf32>
    %111 = vector.broadcast %110 : vector<16x1xf32> to vector<16x32xf32>
    %112 = arith.subf %104, %111 : vector<16x32xf32>
    %113 = arith.mulf %112, %112 : vector<16x32xf32>
    %cst_41 = arith.constant dense<0.000000e+00> : vector<16xf32>
    %114 = vector.multi_reduction <add>, %113, %cst_41 [1] : vector<16x32xf32> to vector<16xf32>
    %115 = vector.shape_cast %114 : vector<16xf32> to vector<16x1xf32>
    %cst_42 = arith.constant 3.200000e+01 : f32
    %116 = vector.broadcast %cst_42 : f32 to vector<16x1xf32>
    %117 = arith.divf %115, %116 : vector<16x1xf32>
    %118 = vector.broadcast %110 : vector<16x1xf32> to vector<16x32xf32>
    %119 = arith.subf %104, %118 : vector<16x32xf32>
    %cst_43 = arith.constant 9.99999974E-6 : f32
    %120 = vector.broadcast %cst_43 : f32 to vector<16x1xf32>
    %121 = arith.addf %117, %120 : vector<16x1xf32>
    %122 = math.rsqrt %121 : vector<16x1xf32>
    %123 = vector.broadcast %122 : vector<16x1xf32> to vector<16x32xf32>
    %124 = arith.mulf %119, %123 : vector<16x32xf32>
    %125 = vector.broadcast %105 : vector<1x32xf32> to vector<16x32xf32>
    %126 = arith.mulf %124, %125 : vector<16x32xf32>
    %127 = vector.broadcast %106 : vector<1x32xf32> to vector<16x32xf32>
    %128 = arith.addf %126, %127 : vector<16x32xf32>
    %c0_44 = arith.constant 0 : index
    %c0_45 = arith.constant 0 : index
    %129 = vector.load %arg5[%c0_44, %c0_45] : memref<32x64xf32, #tpu.memory_space<vmem>>, vector<32x64xf32>
    %cst_46 = arith.constant dense<0.000000e+00> : vector<16x64xf32>
    %130 = tpu.matmul %128, %129, %cst_46 {dimension_numbers = #tpu.dot_dimension_numbers<[1], [0], [0], [1], [0, 0, 1, 1], [], []>} : vector<16x32xf32>, vector<32x64xf32>, vector<16x64xf32> -> vector<16x64xf32>
    %c0_47 = arith.constant 0 : index
    %c0_48 = arith.constant 0 : index
    %131 = vector.load %arg6[%c0_47, %c0_48] : memref<1x64xf32, #tpu.memory_space<vmem>>, vector<1x64xf32>
    %132 = vector.broadcast %131 : vector<1x64xf32> to vector<16x64xf32>
    %133 = arith.addf %130, %132 : vector<16x64xf32>
    %cst_49 = arith.constant 0.000000e+00 : f32
    %134 = vector.broadcast %cst_49 : f32 to vector<16x64xf32>
    %135 = arith.maximumf %133, %134 : vector<16x64xf32>
    %c0_50 = arith.constant 0 : index
    %c0_51 = arith.constant 0 : index
    %136 = vector.load %arg7[%c0_50, %c0_51] : memref<64x32xf32, #tpu.memory_space<vmem>>, vector<64x32xf32>
    %cst_52 = arith.constant dense<0.000000e+00> : vector<16x32xf32>
    %137 = tpu.matmul %135, %136, %cst_52 {dimension_numbers = #tpu.dot_dimension_numbers<[1], [0], [0], [1], [0, 0, 1, 1], [], []>} : vector<16x64xf32>, vector<64x32xf32>, vector<16x32xf32> -> vector<16x32xf32>
    %c0_53 = arith.constant 0 : index
    %c0_54 = arith.constant 0 : index
    %138 = vector.load %arg8[%c0_53, %c0_54] : memref<1x32xf32, #tpu.memory_space<vmem>>, vector<1x32xf32>
    %139 = vector.broadcast %138 : vector<1x32xf32> to vector<16x32xf32>
    %140 = arith.addf %137, %139 : vector<16x32xf32>
    %141 = arith.addf %128, %1 : vector<16x32xf32>
    %142 = arith.addf %141, %140 : vector<16x32xf32>
    %c0_55 = arith.constant 0 : index
    %c0_56 = arith.constant 0 : index
    %143 = vector.load %arg11[%c0_55, %c0_56] : memref<1x32xf32, #tpu.memory_space<vmem>>, vector<1x32xf32>
    %c0_57 = arith.constant 0 : index
    %c0_58 = arith.constant 0 : index
    %144 = vector.load %arg12[%c0_57, %c0_58] : memref<1x32xf32, #tpu.memory_space<vmem>>, vector<1x32xf32>
    %cst_59 = arith.constant dense<0.000000e+00> : vector<16xf32>
    %145 = vector.multi_reduction <add>, %142, %cst_59 [1] : vector<16x32xf32> to vector<16xf32>
    %146 = vector.shape_cast %145 : vector<16xf32> to vector<16x1xf32>
    %cst_60 = arith.constant 3.200000e+01 : f32
    %147 = vector.broadcast %cst_60 : f32 to vector<16x1xf32>
    %148 = arith.divf %146, %147 : vector<16x1xf32>
    %149 = vector.broadcast %148 : vector<16x1xf32> to vector<16x32xf32>
    %150 = arith.subf %142, %149 : vector<16x32xf32>
    %151 = arith.mulf %150, %150 : vector<16x32xf32>
    %cst_61 = arith.constant dense<0.000000e+00> : vector<16xf32>
    %152 = vector.multi_reduction <add>, %151, %cst_61 [1] : vector<16x32xf32> to vector<16xf32>
    %153 = vector.shape_cast %152 : vector<16xf32> to vector<16x1xf32>
    %cst_62 = arith.constant 3.200000e+01 : f32
    %154 = vector.broadcast %cst_62 : f32 to vector<16x1xf32>
    %155 = arith.divf %153, %154 : vector<16x1xf32>
    %156 = vector.broadcast %148 : vector<16x1xf32> to vector<16x32xf32>
    %157 = arith.subf %142, %156 : vector<16x32xf32>
    %cst_63 = arith.constant 9.99999974E-6 : f32
    %158 = vector.broadcast %cst_63 : f32 to vector<16x1xf32>
    %159 = arith.addf %155, %158 : vector<16x1xf32>
    %160 = math.rsqrt %159 : vector<16x1xf32>
    %161 = vector.broadcast %160 : vector<16x1xf32> to vector<16x32xf32>
    %162 = arith.mulf %157, %161 : vector<16x32xf32>
    %163 = vector.broadcast %143 : vector<1x32xf32> to vector<16x32xf32>
    %164 = arith.mulf %162, %163 : vector<16x32xf32>
    %165 = vector.broadcast %144 : vector<1x32xf32> to vector<16x32xf32>
    %166 = arith.addf %164, %165 : vector<16x32xf32>
    %c0_64 = arith.constant 0 : index
    %c0_65 = arith.constant 0 : index
    %167 = vector.load %arg13[%c0_64, %c0_65] : memref<16x32xf32, #tpu.memory_space<vmem>>, vector<16x32xf32>
    tpu.vector_store %arg13[%c0_64, %c0_65], %166 {strides = array<i32>} : memref<16x32xf32, #tpu.memory_space<vmem>>, vector<16x32xf32>,
    return
  }
}

</mosaic_0001>

<llo_original>
// kernel: tpu_custom_call.1
$region0: #{tpu_custom_call.1}
  #allocation0 [shape = 'u32[]', space=smem, size = 0x4, offset = 0x4, fixed_abs, tag = 'smem constant byte address 0x4 - core index']
  #allocation1 [shape = 'u32[72,128]{1,0:T(1,128)}', space=vmem, size = 0x9000, scoped, tag = 'internal scratch']
  %s0 = inlined_call_operand.hbm [shape: f32[16,32], index: 0, kind: input, shape index: {}]
  %s1 = inlined_call_operand.hbm [shape: f32[16,32], index: 1, kind: input, shape index: {}]
  %s2 = inlined_call_operand.hbm [shape: f32[2,8], index: 2, kind: input, shape index: {}]
  %s3 = inlined_call_operand.vmem [shape: f32[32,96], index: 3, kind: input, shape index: {}]
  %s4 = inlined_call_operand.vmem [shape: f32[32,32], index: 4, kind: input, shape index: {}]
  %s5 = inlined_call_operand.vmem [shape: f32[32,64], index: 5, kind: input, shape index: {}]
  %s6 = inlined_call_operand.vmem [shape: f32[1,64], index: 6, kind: input, shape index: {}]
  %s7 = inlined_call_operand.vmem [shape: f32[64,32], index: 7, kind: input, shape index: {}]
  %s8 = inlined_call_operand.vmem [shape: f32[1,32], index: 8, kind: input, shape index: {}]
  %s9 = inlined_call_operand.vmem [shape: f32[1,32], index: 9, kind: input, shape index: {}]
  %s10 = inlined_call_operand.vmem [shape: f32[1,32], index: 10, kind: input, shape index: {}]
  %s11 = inlined_call_operand.vmem [shape: f32[1,32], index: 11, kind: input, shape index: {}]
  %s12 = inlined_call_operand.vmem [shape: f32[1,32], index: 12, kind: input, shape index: {}]
  %s13 = inlined_call_operand.hbm [shape: f32[16,32], index: 13, kind: output, shape index: {}]
  %s14 = sld [smem:[#allocation0]]
  $region74: #{tpu_custom_call.1} parent=0
    _
  %s16 = ssub.s32 1, %s14
  %s17 = scalar_select 0, %s16, %s14
  $region1: #{tpu_custom_call.1} parent=0
    #allocation2 [shape = 'u8[8192]{0}', space=vmem, size = 0x2000, scoped, tag = 'input window, operand 0, single buffered']
    #allocation3 [shape = 's32[1]{0}', space=sflag, size = 0x4, scoped, tag = 'scoped memory for tpu_custom_call.1']
    #allocation4 [shape = 's32[1]{0}', space=sflag, size = 0x4, scoped, tag = 'scoped memory for tpu_custom_call.1']
    #allocation5 [shape = 'u8[8192]{0}', space=vmem, size = 0x2000, scoped, tag = 'input window, operand 1, single buffered']
    #allocation6 [shape = 's32[1]{0}', space=sflag, size = 0x4, scoped, tag = 'scoped memory for tpu_custom_call.1']
    #allocation7 [shape = 'u8[1024]{0}', space=vmem, size = 0x400, scoped, tag = 'input window, operand 2, single buffered']
    #allocation8 [shape = 'u8[8192]{0}', space=vmem, size = 0x2000, scoped, tag = 'output window, operand 0, single buffered']
    %18 = vsyncpa [#allocation3], 0
    %19 = vsyncpa [#allocation6], 0
    %20 = vsyncpa [#allocation4], 0
    // Predicated region
    $region2: #{tpu_custom_call.1} parent=1 // pred_check
      _
    $region3: #{tpu_custom_call.1} parent=1 // pred_check_branch
      %22 = sbr.rel (0) target = $region5
    $region4: #{tpu_custom_call.1} parent=1 // pred_region
      %24 = vsyncadd [#allocation3], 0
      %s25 = sshll.u32 %s0, 4
      %s26 = int_to_ptr.hbm [resolvable:$true] %s25
      %s27 = sshll.u32 [#allocation2], 4
      %s28 = int_to_ptr.vmem [resolvable:$true] %s27
      %33 = dma.hbm_to_vmem [thread:$0]  %s26, 256, %s28, [#allocation3], 128, 128, 8
    $region5: #{tpu_custom_call.1} parent=1 // pred_fallthru
      _
    // Predicated region
    $region6: #{tpu_custom_call.1} parent=1 // pred_check
      _
    $region7: #{tpu_custom_call.1} parent=1 // pred_check_branch
      %35 = sbr.rel (0) target = $region9
    $region8: #{tpu_custom_call.1} parent=1 // pred_region
      %37 = vsyncadd [#allocation6], 0
      %s38 = sshll.u32 %s1, 4
      %s39 = int_to_ptr.hbm [resolvable:$true] %s38
      %s40 = sshll.u32 [#allocation5], 4
      %s41 = int_to_ptr.vmem [resolvable:$true] %s40
      %46 = dma.hbm_to_vmem [thread:$0]  %s39, 256, %s41, [#allocation6], 128, 128, 8
    $region9: #{tpu_custom_call.1} parent=1 // pred_fallthru
      _
    // Predicated region
    $region10: #{tpu_custom_call.1} parent=1 // pred_check
      _
    $region11: #{tpu_custom_call.1} parent=1 // pred_check_branch
      %48 = sbr.rel (0) target = $region13
    $region12: #{tpu_custom_call.1} parent=1 // pred_region
      %50 = vsyncadd [#allocation6], 0
      %s52 = sshll.u32 %s2, 4
      %s53 = int_to_ptr.hbm [resolvable:$true] %s52
      %s54 = sshll.u32 [#allocation7], 4
      %s55 = int_to_ptr.vmem [resolvable:$true] %s54
      %57 = dma.hbm_to_vmem [thread:$0]  %s53, 32, %s55, [#allocation6]
    $region13: #{tpu_custom_call.1} parent=1 // pred_fallthru
      _
    // Predicated region
    $region14: #{tpu_custom_call.1} parent=1 // pred_check
      _
    $region15: #{tpu_custom_call.1} parent=1 // pred_check_branch
      %59 = sbr.rel (0) target = $region17
    $region16: #{tpu_custom_call.1} parent=1 // pred_region
      _
    $region17: #{tpu_custom_call.1} parent=1 // pred_fallthru
      _
    // Predicated region
    $region18: #{tpu_custom_call.1} parent=1 // pred_check
      _
    $region19: #{tpu_custom_call.1} parent=1 // pred_check_branch
      %61 = sbr.rel (0) target = $region21
    $region20: #{tpu_custom_call.1} parent=1 // pred_region
      _
    $region21: #{tpu_custom_call.1} parent=1 // pred_fallthru
      _
    // Predicated region
    $region22: #{tpu_custom_call.1} parent=1 // pred_check
      _
    $region23: #{tpu_custom_call.1} parent=1 // pred_check_branch
      %63 = sbr.rel (0) target = $region25
    $region24: #{tpu_custom_call.1} parent=1 // pred_region
      _
    $region25: #{tpu_custom_call.1} parent=1 // pred_fallthru
      _
    // Predicated region
    $region26: #{tpu_custom_call.1} parent=1 // pred_check
      _
    $region27: #{tpu_custom_call.1} parent=1 // pred_check_branch
      %65 = sbr.rel (0) target = $region29
    $region28: #{tpu_custom_call.1} parent=1 // pred_region
      _
    $region29: #{tpu_custom_call.1} parent=1 // pred_fallthru
      _
    // Predicated region
    $region30: #{tpu_custom_call.1} parent=1 // pred_check
      _
    $region31: #{tpu_custom_call.1} parent=1 // pred_check_branch
      %67 = sbr.rel (0) target = $region33
    $region32: #{tpu_custom_call.1} parent=1 // pred_region
      _
    $region33: #{tpu_custom_call.1} parent=1 // pred_fallthru
      _
    // Predicated region
    $region34: #{tpu_custom_call.1} parent=1 // pred_check
      _
    $region35: #{tpu_custom_call.1} parent=1 // pred_check_branch
      %69 = sbr.rel (0) target = $region37
    $region36: #{tpu_custom_call.1} parent=1 // pred_region
      _
    $region37: #{tpu_custom_call.1} parent=1 // pred_fallthru
      _
    // Predicated region
    $region38: #{tpu_custom_call.1} parent=1 // pred_check
      _
    $region39: #{tpu_custom_call.1} parent=1 // pred_check_branch
      %71 = sbr.rel (0) target = $region41
    $region40: #{tpu_custom_call.1} parent=1 // pred_region
      _
    $region41: #{tpu_custom_call.1} parent=1 // pred_fallthru
      _
    // Predicated region
    $region42: #{tpu_custom_call.1} parent=1 // pred_check
      _
    $region43: #{tpu_custom_call.1} parent=1 // pred_check_branch
      %73 = sbr.rel (0) target = $region45
    $region44: #{tpu_custom_call.1} parent=1 // pred_region
      _
    $region45: #{tpu_custom_call.1} parent=1 // pred_fallthru
      _
    // Predicated region
    $region46: #{tpu_custom_call.1} parent=1 // pred_check
      _
    $region47: #{tpu_custom_call.1} parent=1 // pred_check_branch
      %75 = sbr.rel (0) target = $region49
    $region48: #{tpu_custom_call.1} parent=1 // pred_region
      _
    $region49: #{tpu_custom_call.1} parent=1 // pred_fallthru
      _
    // Predicated region
    $region50: #{tpu_custom_call.1} parent=1 // pred_check
      _
    $region51: #{tpu_custom_call.1} parent=1 // pred_check_branch
      %77 = sbr.rel (0) target = $region53
    $region52: #{tpu_custom_call.1} parent=1 // pred_region
      _
    $region53: #{tpu_custom_call.1} parent=1 // pred_fallthru
      _
    // Predicated region
    $region54: #{tpu_custom_call.1} parent=1 // pred_check
      _
    $region55: #{tpu_custom_call.1} parent=1 // pred_check_branch
      %79 = sbr.rel (0) target = $region57
    $region56: #{tpu_custom_call.1} parent=1 // pred_region
      %81 = dma.done [#allocation3], 256
    $region57: #{tpu_custom_call.1} parent=1 // pred_fallthru
      _
    // Predicated region
    $region58: #{tpu_custom_call.1} parent=1 // pred_check
      _
    $region59: #{tpu_custom_call.1} parent=1 // pred_check_branch
      %83 = sbr.rel (0) target = $region61
    $region60: #{tpu_custom_call.1} parent=1 // pred_region
      %85 = dma.done [#allocation6], 256
    $region61: #{tpu_custom_call.1} parent=1 // pred_fallthru
      _
    // Predicated region
    $region62: #{tpu_custom_call.1} parent=1 // pred_check
      _
    $region63: #{tpu_custom_call.1} parent=1 // pred_check_branch
      %87 = sbr.rel (0) target = $region65
    $region64: #{tpu_custom_call.1} parent=1 // pred_region
      %89 = dma.done [#allocation6], 32
    $region65: #{tpu_custom_call.1} parent=1 // pred_fallthru
      _
    %v90 = vld [vmem:[#allocation2] sm:$0xff]
    %v91 = vld [vmem:[#allocation2 + $0x8] sm:$0xff]
    %v92 = vld [vmem:[#allocation5] sm:$0xff]
    %v93 = vld [vmem:[#allocation5 + $0x8] sm:$0xff]
    %v94 = vld [vmem:[#allocation7] sm:$0x3]
    %vm95 = vcmp.gt.f32.partialorder %v94, 0.0
    %v96 = vsel %vm95, 0.0, -1e+09
    %v97 = vld [vmem:[%s3] sm:$0xff]
    %v98 = vld [vmem:[%s3 + $0x8] sm:$0xff]
    %v99 = vld [vmem:[%s3 + $0x10] sm:$0xff]
    %v100 = vld [vmem:[%s3 + $0x18] sm:$0xff]
    %vm101 = vcmask 261120
    %v103 = vsel %vm101, %v90, 0
    %v106 = vsel %vm101, %v91, 0
    %108 = vmatpush.msra.mxu0 0.0
    %109 = vmatpush.msra.mxu0 0.0
    %110 = vmatpush.msra.mxu0 0.0
    %111 = vmatpush.msra.mxu0 0.0
    %112 = vmatpush.msra.mxu0 0.0
    %113 = vmatpush.msra.mxu0 0.0
    %114 = vmatpush.msra.mxu0 0.0
    %115 = vmatpush.msra.mxu0 0.0
    %116 = vmatpush.msra.mxu0 0.0
    %117 = vmatpush.msra.mxu0 0.0
    %118 = vmatpush.msra.mxu0 0.0
    %119 = vmatpush.msra.mxu0 0.0
    %120 = vmatpush.msra.mxu0 %v100
    %121 = vmatpush.msra.mxu0 %v99
    %122 = vmatpush.msra.mxu0 %v98
    %123 = vmatpush.msra.mxu0 %v97
    %124 = vmatmul.f32.gmra.mxu0 %v103
    %v125 = vpop.f32.mrf.mxu0
    %v126 = vadd.f32 0.0, %v125
    %127 = vmatmul.f32.gmra.mxu0 %v106
    %v128 = vpop.f32.mrf.mxu0
    %v129 = vadd.f32 0.0, %v128
    %130 = vdwg.mxu0
    %132 = vrot.lane.b32.xlu0 %v126, 96
    %v133 = vpop.permute.xlu0 %132
    %vm134 = vcmask 64512
    %v135 = vsel %vm134, %v126, 0
    %v137 = vsel %vm134, %v133, 0
    %139 = vmatpush.xpose.msra.mxu0 0.0
    %140 = vmatpush.xpose.msra.mxu0 0.0
    %141 = vmatpush.xpose.msra.mxu0 0.0
    %142 = vmatpush.xpose.msra.mxu0 0.0
    %143 = vmatpush.xpose.msra.mxu0 0.0
    %144 = vmatpush.xpose.msra.mxu0 0.0
    %145 = vmatpush.xpose.msra.mxu0 0.0
    %146 = vmatpush.xpose.msra.mxu0 0.0
    %147 = vmatpush.xpose.msra.mxu0 0.0
    %148 = vmatpush.xpose.msra.mxu0 0.0
    %149 = vmatpush.xpose.msra.mxu0 0.0
    %150 = vmatpush.xpose.msra.mxu0 0.0
    %151 = vmatpush.xpose.msra.mxu0 0.0
    %152 = vmatpush.xpose.msra.mxu0 0.0
    %153 = vmatpush.xpose.msra.mxu0 0.0
    %154 = vmatpush.xpose.msra.mxu0 %v137
    %155 = vmatmul.f32.gmra.mxu0 %v135
    %v156 = vpop.f32.mrf.mxu0
    %v157 = vadd.f32 0.0, %v156
    %158 = vdwg.mxu0
    %159 = vrot.lane.b32.xlu0 %v126, 120
    %v160 = vpop.permute.xlu0 %159
    %161 = vrot.lane.b32.xlu0 %v126, 88
    %v162 = vpop.permute.xlu0 %161
    %v163 = vsel %vm134, %v160, 0
    %v165 = vsel %vm134, %v162, 0
    %167 = vmatpush.xpose.msra.mxu0 0.0
    %168 = vmatpush.xpose.msra.mxu0 0.0
    %169 = vmatpush.xpose.msra.mxu0 0.0
    %170 = vmatpush.xpose.msra.mxu0 0.0
    %171 = vmatpush.xpose.msra.mxu0 0.0
    %172 = vmatpush.xpose.msra.mxu0 0.0
    %173 = vmatpush.xpose.msra.mxu0 0.0
    %174 = vmatpush.xpose.msra.mxu0 0.0
    %175 = vmatpush.xpose.msra.mxu0 0.0
    %176 = vmatpush.xpose.msra.mxu0 0.0
    %177 = vmatpush.xpose.msra.mxu0 0.0
    %178 = vmatpush.xpose.msra.mxu0 0.0
    %179 = vmatpush.xpose.msra.mxu0 0.0
    %180 = vmatpush.xpose.msra.mxu0 0.0
    %181 = vmatpush.xpose.msra.mxu0 0.0
    %182 = vmatpush.xpose.msra.mxu0 %v165
    %183 = vmatmul.f32.gmra.mxu0 %v163
    %v184 = vpop.f32.mrf.mxu0
    %v185 = vadd.f32 0.0, %v184
    %186 = vdwg.mxu0
    %187 = vrot.lane.b32.xlu0 %v126, 112
    %v188 = vpop.permute.xlu0 %187
    %189 = vrot.lane.b32.xlu0 %v126, 80
    %v190 = vpop.permute.xlu0 %189
    %v191 = vsel %vm134, %v188, 0
    %v193 = vsel %vm134, %v190, 0
    %195 = vmatpush.xpose.msra.mxu0 0.0
    %196 = vmatpush.xpose.msra.mxu0 0.0
    %197 = vmatpush.xpose.msra.mxu0 0.0
    %198 = vmatpush.xpose.msra.mxu0 0.0
    %199 = vmatpush.xpose.msra.mxu0 0.0
    %200 = vmatpush.xpose.msra.mxu0 0.0
    %201 = vmatpush.xpose.msra.mxu0 0.0
    %202 = vmatpush.xpose.msra.mxu0 0.0
    %203 = vmatpush.xpose.msra.mxu0 0.0
    %204 = vmatpush.xpose.msra.mxu0 0.0
    %205 = vmatpush.xpose.msra.mxu0 0.0
    %206 = vmatpush.xpose.msra.mxu0 0.0
    %207 = vmatpush.xpose.msra.mxu0 0.0
    %208 = vmatpush.xpose.msra.mxu0 0.0
    %209 = vmatpush.xpose.msra.mxu0 0.0
    %210 = vmatpush.xpose.msra.mxu0 %v193
    %211 = vmatmul.f32.gmra.mxu0 %v191
    %v212 = vpop.f32.mrf.mxu0
    %v213 = vadd.f32 0.0, %v212
    %214 = vdwg.mxu0
    %215 = vrot.lane.b32.xlu0 %v126, 104
    %v216 = vpop.permute.xlu0 %215
    %217 = vrot.lane.b32.xlu0 %v126, 72
    %v218 = vpop.permute.xlu0 %217
    %v219 = vsel %vm134, %v216, 0
    %v221 = vsel %vm134, %v218, 0
    %223 = vmatpush.xpose.msra.mxu0 0.0
    %224 = vmatpush.xpose.msra.mxu0 0.0
    %225 = vmatpush.xpose.msra.mxu0 0.0
    %226 = vmatpush.xpose.msra.mxu0 0.0
    %227 = vmatpush.xpose.msra.mxu0 0.0
    %228 = vmatpush.xpose.msra.mxu0 0.0
    %229 = vmatpush.xpose.msra.mxu0 0.0
    %230 = vmatpush.xpose.msra.mxu0 0.0
    %231 = vmatpush.xpose.msra.mxu0 0.0
    %232 = vmatpush.xpose.msra.mxu0 0.0
    %233 = vmatpush.xpose.msra.mxu0 0.0
    %234 = vmatpush.xpose.msra.mxu0 0.0
    %235 = vmatpush.xpose.msra.mxu0 0.0
    %236 = vmatpush.xpose.msra.mxu0 0.0
    %237 = vmatpush.xpose.msra.mxu0 0.0
    %238 = vmatpush.xpose.msra.mxu0 %v221
    %239 = vmatmul.f32.gmra.mxu0 %v219
    %v240 = vpop.f32.mrf.mxu0
    %v241 = vadd.f32 0.0, %v240
    %242 = vdwg.mxu0
    %v243 = vperm.slane %v96, 0
    %v244 = vadd.f32 %v157, %v243
    %v245 = vadd.f32 %v185, %v243
    %v246 = vadd.f32 %v213, %v243
    %v247 = vadd.f32 %v241, %v243
    %v248 = vsel %vm134, %v244, -inf
    %249 = vmax.xlane.f32.xlu0 %v248
    %v250 = vpop.xlane.xlu0 %249
    %v251 = vsel %vm134, %v245, -inf
    %252 = vmax.xlane.f32.xlu0 %v251
    %v253 = vpop.xlane.xlu0 %252
    %v254 = vsel %vm134, %v246, -inf
    %255 = vmax.xlane.f32.xlu0 %v254
    %v256 = vpop.xlane.xlu0 %255
    %v257 = vsel %vm134, %v247, -inf
    %258 = vmax.xlane.f32.xlu0 %v257
    %v259 = vpop.xlane.xlu0 %258
    %v260 = vsub.f32 %v244, %v250
    %v261 = vsub.f32 %v245, %v253
    %v262 = vsub.f32 %v246, %v256
    %v263 = vsub.f32 %v247, %v259
    %v264 = vmul.f32 %v260, 1.442695
    %v265 = vpow.pop %v264
    %v266 = vmul.f32 %v261, 1.442695
    %v267 = vpow.pop %v266
    %v268 = vmul.f32 %v262, 1.442695
    %v269 = vpow.pop %v268
    %v270 = vmul.f32 %v263, 1.442695
    %v271 = vpow.pop %v270
    %v272 = vsel %vm134, %v265, 0.0
    %273 = vadd.xlane.f32.xlu0 %v272
    %v274 = vpop.xlane.xlu0 %273
    %v275 = vsel %vm134, %v267, 0.0
    %276 = vadd.xlane.f32.xlu0 %v275
    %v277 = vpop.xlane.xlu0 %276
    %v278 = vsel %vm134, %v269, 0.0
    %279 = vadd.xlane.f32.xlu0 %v278
    %v280 = vpop.xlane.xlu0 %279
    %v281 = vsel %vm134, %v271, 0.0
    %282 = vadd.xlane.f32.xlu0 %v281
    %v283 = vpop.xlane.xlu0 %282
    %v284 = vrcp.pop %v274
    %v285 = vmul.f32 %v274, %v284
    %v286 = vsub.f32 1.0, %v285
    %v287 = vmul.f32 %v284, %v286
    %v288 = vadd.f32 %v284, %v287
    %vm289 = vweird.f32 %v274
    %vm290 = vweird.f32 %v284
    %vm291 = vmor %vm289, %vm290
    %v292 = vsel %vm291, %v284, %v288
    %v293 = vand.u32 2147483647, %v274
    %vm294 = vcmp.eq.f32.partialorder %v293, 8.507059e+37
    %v295 = vand.u32 %v274, 2147483648
    %v296 = vor.u32 1.1754944e-38, %v295
    %v297 = vsel %vm294, %v296, %v292
    %v298 = vmul.f32 %v265, %v297
    %v299 = vrcp.pop %v277
    %v300 = vmul.f32 %v277, %v299
    %v301 = vsub.f32 1.0, %v300
    %v302 = vmul.f32 %v299, %v301
    %v303 = vadd.f32 %v299, %v302
    %vm304 = vweird.f32 %v277
    %vm305 = vweird.f32 %v299
    %vm306 = vmor %vm304, %vm305
    %v307 = vsel %vm306, %v299, %v303
    %v308 = vand.u32 2147483647, %v277
    %vm309 = vcmp.eq.f32.partialorder %v308, 8.507059e+37
    %v310 = vand.u32 %v277, 2147483648
    %v311 = vor.u32 1.1754944e-38, %v310
    %v312 = vsel %vm309, %v311, %v307
    %v313 = vmul.f32 %v267, %v312
    %v314 = vrcp.pop %v280
    %v315 = vmul.f32 %v280, %v314
    %v316 = vsub.f32 1.0, %v315
    %v317 = vmul.f32 %v314, %v316
    %v318 = vadd.f32 %v314, %v317
    %vm319 = vweird.f32 %v280
    %vm320 = vweird.f32 %v314
    %vm321 = vmor %vm319, %vm320
    %v322 = vsel %vm321, %v314, %v318
    %v323 = vand.u32 2147483647, %v280
    %vm324 = vcmp.eq.f32.partialorder %v323, 8.507059e+37
    %v325 = vand.u32 %v280, 2147483648
    %v326 = vor.u32 1.1754944e-38, %v325
    %v327 = vsel %vm324, %v326, %v322
    %v328 = vmul.f32 %v269, %v327
    %v329 = vrcp.pop %v283
    %v330 = vmul.f32 %v283, %v329
    %v331 = vsub.f32 1.0, %v330
    %v332 = vmul.f32 %v329, %v331
    %v333 = vadd.f32 %v329, %v332
    %vm334 = vweird.f32 %v283
    %vm335 = vweird.f32 %v329
    %vm336 = vmor %vm334, %vm335
    %v337 = vsel %vm336, %v329, %v333
    %v338 = vand.u32 2147483647, %v283
    %vm339 = vcmp.eq.f32.partialorder %v338, 8.507059e+37
    %v340 = vand.u32 %v283, 2147483648
    %v341 = vor.u32 1.1754944e-38, %v340
    %v342 = vsel %vm339, %v341, %v337
    %v343 = vmul.f32 %v271, %v342
    %344 = vrot.lane.b32.xlu0 %v126, 64
    %v345 = vpop.permute.xlu0 %344
    %v348 = vsel %vm134, %v298, 0
    %350 = vmatpush.msra.mxu0 0.0
    %351 = vmatpush.msra.mxu0 0.0
    %352 = vmatpush.msra.mxu0 0.0
    %353 = vmatpush.msra.mxu0 0.0
    %354 = vmatpush.msra.mxu0 0.0
    %355 = vmatpush.msra.mxu0 0.0
    %356 = vmatpush.msra.mxu0 0.0
    %357 = vmatpush.msra.mxu0 0.0
    %358 = vmatpush.msra.mxu0 0.0
    %359 = vmatpush.msra.mxu0 0.0
    %360 = vmatpush.msra.mxu0 0.0
    %361 = vmatpush.msra.mxu0 0.0
    %362 = vmatpush.msra.mxu0 0.0
    %363 = vmatpush.msra.mxu0 0.0
    %364 = vmatpush.msra.mxu0 0.0
    %365 = vmatpush.msra.mxu0 %v345
    %366 = vmatmul.f32.gmra.mxu0 %v348
    %v367 = vpop.f32.mrf.mxu0
    %v368 = vadd.f32 0.0, %v367
    %369 = vdwg.mxu0
    %370 = vrot.lane.b32.xlu0 %v126, 56
    %v371 = vpop.permute.xlu0 %370
    %v374 = vsel %vm134, %v313, 0
    %376 = vmatpush.msra.mxu0 0.0
    %377 = vmatpush.msra.mxu0 0.0
    %378 = vmatpush.msra.mxu0 0.0
    %379 = vmatpush.msra.mxu0 0.0
    %380 = vmatpush.msra.mxu0 0.0
    %381 = vmatpush.msra.mxu0 0.0
    %382 = vmatpush.msra.mxu0 0.0
    %383 = vmatpush.msra.mxu0 0.0
    %384 = vmatpush.msra.mxu0 0.0
    %385 = vmatpush.msra.mxu0 0.0
    %386 = vmatpush.msra.mxu0 0.0
    %387 = vmatpush.msra.mxu0 0.0
    %388 = vmatpush.msra.mxu0 0.0
    %389 = vmatpush.msra.mxu0 0.0
    %390 = vmatpush.msra.mxu0 0.0
    %391 = vmatpush.msra.mxu0 %v371
    %392 = vmatmul.f32.gmra.mxu0 %v374
    %v393 = vpop.f32.mrf.mxu0
    %v394 = vadd.f32 0.0, %v393
    %395 = vdwg.mxu0
    %396 = vrot.lane.b32.xlu0 %v126, 48
    %v397 = vpop.permute.xlu0 %396
    %v400 = vsel %vm134, %v328, 0
    %402 = vmatpush.msra.mxu0 0.0
    %403 = vmatpush.msra.mxu0 0.0
    %404 = vmatpush.msra.mxu0 0.0
    %405 = vmatpush.msra.mxu0 0.0
    %406 = vmatpush.msra.mxu0 0.0
    %407 = vmatpush.msra.mxu0 0.0
    %408 = vmatpush.msra.mxu0 0.0
    %409 = vmatpush.msra.mxu0 0.0
    %410 = vmatpush.msra.mxu0 0.0
    %411 = vmatpush.msra.mxu0 0.0
    %412 = vmatpush.msra.mxu0 0.0
    %413 = vmatpush.msra.mxu0 0.0
    %414 = vmatpush.msra.mxu0 0.0
    %415 = vmatpush.msra.mxu0 0.0
    %416 = vmatpush.msra.mxu0 0.0
    %417 = vmatpush.msra.mxu0 %v397
    %418 = vmatmul.f32.gmra.mxu0 %v400
    %v419 = vpop.f32.mrf.mxu0
    %v420 = vadd.f32 0.0, %v419
    %421 = vdwg.mxu0
    %422 = vrot.lane.b32.xlu0 %v126, 40
    %v423 = vpop.permute.xlu0 %422
    %v426 = vsel %vm134, %v343, 0
    %428 = vmatpush.msra.mxu0 0.0
    %429 = vmatpush.msra.mxu0 0.0
    %430 = vmatpush.msra.mxu0 0.0
    %431 = vmatpush.msra.mxu0 0.0
    %432 = vmatpush.msra.mxu0 0.0
    %433 = vmatpush.msra.mxu0 0.0
    %434 = vmatpush.msra.mxu0 0.0
    %435 = vmatpush.msra.mxu0 0.0
    %436 = vmatpush.msra.mxu0 0.0
    %437 = vmatpush.msra.mxu0 0.0
    %438 = vmatpush.msra.mxu0 0.0
    %439 = vmatpush.msra.mxu0 0.0
    %440 = vmatpush.msra.mxu0 0.0
    %441 = vmatpush.msra.mxu0 0.0
    %442 = vmatpush.msra.mxu0 0.0
    %443 = vmatpush.msra.mxu0 %v423
    %444 = vmatmul.f32.gmra.mxu0 %v426
    %v445 = vpop.f32.mrf.mxu0
    %v446 = vadd.f32 0.0, %v445
    %447 = vdwg.mxu0
    %449 = vrot.lane.b32.xlu0 %v394, 8
    %v450 = vpop.permute.xlu0 %449
    %453 = vrot.lane.b32.xlu0 %v420, 16
    %v454 = vpop.permute.xlu0 %453
    %457 = vrot.lane.b32.xlu0 %v446, 24
    %v458 = vpop.permute.xlu0 %457
    %v460 = vsel %vm134, %v368, %v450
    %vm461 = vcmask 130048
    %v462 = vsel %vm461, %v460, %v454
    %vm463 = vcmask 195584
    %v464 = vsel %vm463, %v462, %v458
    %466 = vrot.lane.b32.xlu0 %v129, 96
    %v467 = vpop.permute.xlu0 %466
    %v468 = vsel %vm134, %v129, 0
    %v470 = vsel %vm134, %v467, 0
    %472 = vmatpush.xpose.msra.mxu0 0.0
    %473 = vmatpush.xpose.msra.mxu0 0.0
    %474 = vmatpush.xpose.msra.mxu0 0.0
    %475 = vmatpush.xpose.msra.mxu0 0.0
    %476 = vmatpush.xpose.msra.mxu0 0.0
    %477 = vmatpush.xpose.msra.mxu0 0.0
    %478 = vmatpush.xpose.msra.mxu0 0.0
    %479 = vmatpush.xpose.msra.mxu0 0.0
    %480 = vmatpush.xpose.msra.mxu0 0.0
    %481 = vmatpush.xpose.msra.mxu0 0.0
    %482 = vmatpush.xpose.msra.mxu0 0.0
    %483 = vmatpush.xpose.msra.mxu0 0.0
    %484 = vmatpush.xpose.msra.mxu0 0.0
    %485 = vmatpush.xpose.msra.mxu0 0.0
    %486 = vmatpush.xpose.msra.mxu0 0.0
    %487 = vmatpush.xpose.msra.mxu0 %v470
    %488 = vmatmul.f32.gmra.mxu0 %v468
    %v489 = vpop.f32.mrf.mxu0
    %v490 = vadd.f32 0.0, %v489
    %491 = vdwg.mxu0
    %492 = vrot.lane.b32.xlu0 %v129, 120
    %v493 = vpop.permute.xlu0 %492
    %494 = vrot.lane.b32.xlu0 %v129, 88
    %v495 = vpop.permute.xlu0 %494
    %v496 = vsel %vm134, %v493, 0
    %v498 = vsel %vm134, %v495, 0
    %500 = vmatpush.xpose.msra.mxu0 0.0
    %501 = vmatpush.xpose.msra.mxu0 0.0
    %502 = vmatpush.xpose.msra.mxu0 0.0
    %503 = vmatpush.xpose.msra.mxu0 0.0
    %504 = vmatpush.xpose.msra.mxu0 0.0
    %505 = vmatpush.xpose.msra.mxu0 0.0
    %506 = vmatpush.xpose.msra.mxu0 0.0
    %507 = vmatpush.xpose.msra.mxu0 0.0
    %508 = vmatpush.xpose.msra.mxu0 0.0
    %509 = vmatpush.xpose.msra.mxu0 0.0
    %510 = vmatpush.xpose.msra.mxu0 0.0
    %511 = vmatpush.xpose.msra.mxu0 0.0
    %512 = vmatpush.xpose.msra.mxu0 0.0
    %513 = vmatpush.xpose.msra.mxu0 0.0
    %514 = vmatpush.xpose.msra.mxu0 0.0
    %515 = vmatpush.xpose.msra.mxu0 %v498
    %516 = vmatmul.f32.gmra.mxu0 %v496
    %v517 = vpop.f32.mrf.mxu0
    %v518 = vadd.f32 0.0, %v517
    %519 = vdwg.mxu0
    %520 = vrot.lane.b32.xlu0 %v129, 112
    %v521 = vpop.permute.xlu0 %520
    %522 = vrot.lane.b32.xlu0 %v129, 80
    %v523 = vpop.permute.xlu0 %522
    %v524 = vsel %vm134, %v521, 0
    %v526 = vsel %vm134, %v523, 0
    %528 = vmatpush.xpose.msra.mxu0 0.0
    %529 = vmatpush.xpose.msra.mxu0 0.0
    %530 = vmatpush.xpose.msra.mxu0 0.0
    %531 = vmatpush.xpose.msra.mxu0 0.0
    %532 = vmatpush.xpose.msra.mxu0 0.0
    %533 = vmatpush.xpose.msra.mxu0 0.0
    %534 = vmatpush.xpose.msra.mxu0 0.0
    %535 = vmatpush.xpose.msra.mxu0 0.0
    %536 = vmatpush.xpose.msra.mxu0 0.0
    %537 = vmatpush.xpose.msra.mxu0 0.0
    %538 = vmatpush.xpose.msra.mxu0 0.0
    %539 = vmatpush.xpose.msra.mxu0 0.0
    %540 = vmatpush.xpose.msra.mxu0 0.0
    %541 = vmatpush.xpose.msra.mxu0 0.0
    %542 = vmatpush.xpose.msra.mxu0 0.0
    %543 = vmatpush.xpose.msra.mxu0 %v526
    %544 = vmatmul.f32.gmra.mxu0 %v524
    %v545 = vpop.f32.mrf.mxu0
    %v546 = vadd.f32 0.0, %v545
    %547 = vdwg.mxu0
    %548 = vrot.lane.b32.xlu0 %v129, 104
    %v549 = vpop.permute.xlu0 %548
    %550 = vrot.lane.b32.xlu0 %v129, 72
    %v551 = vpop.permute.xlu0 %550
    %v552 = vsel %vm134, %v549, 0
    %v554 = vsel %vm134, %v551, 0
    %556 = vmatpush.xpose.msra.mxu0 0.0
    %557 = vmatpush.xpose.msra.mxu0 0.0
    %558 = vmatpush.xpose.msra.mxu0 0.0
    %559 = vmatpush.xpose.msra.mxu0 0.0
    %560 = vmatpush.xpose.msra.mxu0 0.0
    %561 = vmatpush.xpose.msra.mxu0 0.0
    %562 = vmatpush.xpose.msra.mxu0 0.0
    %563 = vmatpush.xpose.msra.mxu0 0.0
    %564 = vmatpush.xpose.msra.mxu0 0.0
    %565 = vmatpush.xpose.msra.mxu0 0.0
    %566 = vmatpush.xpose.msra.mxu0 0.0
    %567 = vmatpush.xpose.msra.mxu0 0.0
    %568 = vmatpush.xpose.msra.mxu0 0.0
    %569 = vmatpush.xpose.msra.mxu0 0.0
    %570 = vmatpush.xpose.msra.mxu0 0.0
    %571 = vmatpush.xpose.msra.mxu0 %v554
    %572 = vmatmul.f32.gmra.mxu0 %v552
    %v573 = vpop.f32.mrf.mxu0
    %v574 = vadd.f32 0.0, %v573
    %575 = vdwg.mxu0
    %v576 = vperm.slane %v96, 1
    %v577 = vadd.f32 %v490, %v576
    %v578 = vadd.f32 %v518, %v576
    %v579 = vadd.f32 %v546, %v576
    %v580 = vadd.f32 %v574, %v576
    %v581 = vsel %vm134, %v577, -inf
    %582 = vmax.xlane.f32.xlu0 %v581
    %v583 = vpop.xlane.xlu0 %582
    %v584 = vsel %vm134, %v578, -inf
    %585 = vmax.xlane.f32.xlu0 %v584
    %v586 = vpop.xlane.xlu0 %585
    %v587 = vsel %vm134, %v579, -inf
    %588 = vmax.xlane.f32.xlu0 %v587
    %v589 = vpop.xlane.xlu0 %588
    %v590 = vsel %vm134, %v580, -inf
    %591 = vmax.xlane.f32.xlu0 %v590
    %v592 = vpop.xlane.xlu0 %591
    %v593 = vsub.f32 %v577, %v583
    %v594 = vsub.f32 %v578, %v586
    %v595 = vsub.f32 %v579, %v589
    %v596 = vsub.f32 %v580, %v592
    %v597 = vmul.f32 %v593, 1.442695
    %v598 = vpow.pop %v597
    %v599 = vmul.f32 %v594, 1.442695
    %v600 = vpow.pop %v599
    %v601 = vmul.f32 %v595, 1.442695
    %v602 = vpow.pop %v601
    %v603 = vmul.f32 %v596, 1.442695
    %v604 = vpow.pop %v603
    %v605 = vsel %vm134, %v598, 0.0
    %606 = vadd.xlane.f32.xlu0 %v605
    %v607 = vpop.xlane.xlu0 %606
    %v608 = vsel %vm134, %v600, 0.0
    %609 = vadd.xlane.f32.xlu0 %v608
    %v610 = vpop.xlane.xlu0 %609
    %v611 = vsel %vm134, %v602, 0.0
    %612 = vadd.xlane.f32.xlu0 %v611
    %v613 = vpop.xlane.xlu0 %612
    %v614 = vsel %vm134, %v604, 0.0
    %615 = vadd.xlane.f32.xlu0 %v614
    %v616 = vpop.xlane.xlu0 %615
    %v617 = vrcp.pop %v607
    %v618 = vmul.f32 %v607, %v617
    %v619 = vsub.f32 1.0, %v618
    %v620 = vmul.f32 %v617, %v619
    %v621 = vadd.f32 %v617, %v620
    %vm622 = vweird.f32 %v607
    %vm623 = vweird.f32 %v617
    %vm624 = vmor %vm622, %vm623
    %v625 = vsel %vm624, %v617, %v621
    %v626 = vand.u32 2147483647, %v607
    %vm627 = vcmp.eq.f32.partialorder %v626, 8.507059e+37
    %v628 = vand.u32 %v607, 2147483648
    %v629 = vor.u32 1.1754944e-38, %v628
    %v630 = vsel %vm627, %v629, %v625
    %v631 = vmul.f32 %v598, %v630
    %v632 = vrcp.pop %v610
    %v633 = vmul.f32 %v610, %v632
    %v634 = vsub.f32 1.0, %v633
    %v635 = vmul.f32 %v632, %v634
    %v636 = vadd.f32 %v632, %v635
    %vm637 = vweird.f32 %v610
    %vm638 = vweird.f32 %v632
    %vm639 = vmor %vm637, %vm638
    %v640 = vsel %vm639, %v632, %v636
    %v641 = vand.u32 2147483647, %v610
    %vm642 = vcmp.eq.f32.partialorder %v641, 8.507059e+37
    %v643 = vand.u32 %v610, 2147483648
    %v644 = vor.u32 1.1754944e-38, %v643
    %v645 = vsel %vm642, %v644, %v640
    %v646 = vmul.f32 %v600, %v645
    %v647 = vrcp.pop %v613
    %v648 = vmul.f32 %v613, %v647
    %v649 = vsub.f32 1.0, %v648
    %v650 = vmul.f32 %v647, %v649
    %v651 = vadd.f32 %v647, %v650
    %vm652 = vweird.f32 %v613
    %vm653 = vweird.f32 %v647
    %vm654 = vmor %vm652, %vm653
    %v655 = vsel %vm654, %v647, %v651
    %v656 = vand.u32 2147483647, %v613
    %vm657 = vcmp.eq.f32.partialorder %v656, 8.507059e+37
    %v658 = vand.u32 %v613, 2147483648
    %v659 = vor.u32 1.1754944e-38, %v658
    %v660 = vsel %vm657, %v659, %v655
    %v661 = vmul.f32 %v602, %v660
    %v662 = vrcp.pop %v616
    %v663 = vmul.f32 %v616, %v662
    %v664 = vsub.f32 1.0, %v663
    %v665 = vmul.f32 %v662, %v664
    %v666 = vadd.f32 %v662, %v665
    %vm667 = vweird.f32 %v616
    %vm668 = vweird.f32 %v662
    %vm669 = vmor %vm667, %vm668
    %v670 = vsel %vm669, %v662, %v666
    %v671 = vand.u32 2147483647, %v616
    %vm672 = vcmp.eq.f32.partialorder %v671, 8.507059e+37
    %v673 = vand.u32 %v616, 2147483648
    %v674 = vor.u32 1.1754944e-38, %v673
    %v675 = vsel %vm672, %v674, %v670
    %v676 = vmul.f32 %v604, %v675
    %677 = vrot.lane.b32.xlu0 %v129, 64
    %v678 = vpop.permute.xlu0 %677
    %v681 = vsel %vm134, %v631, 0
    %683 = vmatpush.msra.mxu0 0.0
    %684 = vmatpush.msra.mxu0 0.0
    %685 = vmatpush.msra.mxu0 0.0
    %686 = vmatpush.msra.mxu0 0.0
    %687 = vmatpush.msra.mxu0 0.0
    %688 = vmatpush.msra.mxu0 0.0
    %689 = vmatpush.msra.mxu0 0.0
    %690 = vmatpush.msra.mxu0 0.0
    %691 = vmatpush.msra.mxu0 0.0
    %692 = vmatpush.msra.mxu0 0.0
    %693 = vmatpush.msra.mxu0 0.0
    %694 = vmatpush.msra.mxu0 0.0
    %695 = vmatpush.msra.mxu0 0.0
    %696 = vmatpush.msra.mxu0 0.0
    %697 = vmatpush.msra.mxu0 0.0
    %698 = vmatpush.msra.mxu0 %v678
    %699 = vmatmul.f32.gmra.mxu0 %v681
    %v700 = vpop.f32.mrf.mxu0
    %v701 = vadd.f32 0.0, %v700
    %702 = vdwg.mxu0
    %703 = vrot.lane.b32.xlu0 %v129, 56
    %v704 = vpop.permute.xlu0 %703
    %v707 = vsel %vm134, %v646, 0
    %709 = vmatpush.msra.mxu0 0.0
    %710 = vmatpush.msra.mxu0 0.0
    %711 = vmatpush.msra.mxu0 0.0
    %712 = vmatpush.msra.mxu0 0.0
    %713 = vmatpush.msra.mxu0 0.0
    %714 = vmatpush.msra.mxu0 0.0
    %715 = vmatpush.msra.mxu0 0.0
    %716 = vmatpush.msra.mxu0 0.0
    %717 = vmatpush.msra.mxu0 0.0
    %718 = vmatpush.msra.mxu0 0.0
    %719 = vmatpush.msra.mxu0 0.0
    %720 = vmatpush.msra.mxu0 0.0
    %721 = vmatpush.msra.mxu0 0.0
    %722 = vmatpush.msra.mxu0 0.0
    %723 = vmatpush.msra.mxu0 0.0
    %724 = vmatpush.msra.mxu0 %v704
    %725 = vmatmul.f32.gmra.mxu0 %v707
    %v726 = vpop.f32.mrf.mxu0
    %v727 = vadd.f32 0.0, %v726
    %728 = vdwg.mxu0
    %729 = vrot.lane.b32.xlu0 %v129, 48
    %v730 = vpop.permute.xlu0 %729
    %v733 = vsel %vm134, %v661, 0
    %735 = vmatpush.msra.mxu0 0.0
    %736 = vmatpush.msra.mxu0 0.0
    %737 = vmatpush.msra.mxu0 0.0
    %738 = vmatpush.msra.mxu0 0.0
    %739 = vmatpush.msra.mxu0 0.0
    %740 = vmatpush.msra.mxu0 0.0
    %741 = vmatpush.msra.mxu0 0.0
    %742 = vmatpush.msra.mxu0 0.0
    %743 = vmatpush.msra.mxu0 0.0
    %744 = vmatpush.msra.mxu0 0.0
    %745 = vmatpush.msra.mxu0 0.0
    %746 = vmatpush.msra.mxu0 0.0
    %747 = vmatpush.msra.mxu0 0.0
    %748 = vmatpush.msra.mxu0 0.0
    %749 = vmatpush.msra.mxu0 0.0
    %750 = vmatpush.msra.mxu0 %v730
    %751 = vmatmul.f32.gmra.mxu0 %v733
    %v752 = vpop.f32.mrf.mxu0
    %v753 = vadd.f32 0.0, %v752
    %754 = vdwg.mxu0
    %755 = vrot.lane.b32.xlu0 %v129, 40
    %v756 = vpop.permute.xlu0 %755
    %v759 = vsel %vm134, %v676, 0
    %761 = vmatpush.msra.mxu0 0.0
    %762 = vmatpush.msra.mxu0 0.0
    %763 = vmatpush.msra.mxu0 0.0
    %764 = vmatpush.msra.mxu0 0.0
    %765 = vmatpush.msra.mxu0 0.0
    %766 = vmatpush.msra.mxu0 0.0
    %767 = vmatpush.msra.mxu0 0.0
    %768 = vmatpush.msra.mxu0 0.0
    %769 = vmatpush.msra.mxu0 0.0
    %770 = vmatpush.msra.mxu0 0.0
    %771 = vmatpush.msra.mxu0 0.0
    %772 = vmatpush.msra.mxu0 0.0
    %773 = vmatpush.msra.mxu0 0.0
    %774 = vmatpush.msra.mxu0 0.0
    %775 = vmatpush.msra.mxu0 0.0
    %776 = vmatpush.msra.mxu0 %v756
    %777 = vmatmul.f32.gmra.mxu0 %v759
    %v778 = vpop.f32.mrf.mxu0
    %v779 = vadd.f32 0.0, %v778
    %780 = vdwg.mxu0
    %782 = vrot.lane.b32.xlu0 %v727, 8
    %v783 = vpop.permute.xlu0 %782
    %786 = vrot.lane.b32.xlu0 %v753, 16
    %v787 = vpop.permute.xlu0 %786
    %790 = vrot.lane.b32.xlu0 %v779, 24
    %v791 = vpop.permute.xlu0 %790
    %v793 = vsel %vm134, %v701, %v783
    %v794 = vsel %vm461, %v793, %v787
    %v795 = vsel %vm463, %v794, %v791
    %v796 = vld [vmem:[%s4] sm:$0xff]
    %v797 = vld [vmem:[%s4 + $0x8] sm:$0xff]
    %v798 = vld [vmem:[%s4 + $0x10] sm:$0xff]
    %v799 = vld [vmem:[%s4 + $0x18] sm:$0xff]
    %v801 = vsel %vm101, %v464, 0
    %v804 = vsel %vm101, %v795, 0
    %806 = vmatpush.msra.mxu0 0.0
    %807 = vmatpush.msra.mxu0 0.0
    %808 = vmatpush.msra.mxu0 0.0
    %809 = vmatpush.msra.mxu0 0.0
    %810 = vmatpush.msra.mxu0 0.0
    %811 = vmatpush.msra.mxu0 0.0
    %812 = vmatpush.msra.mxu0 0.0
    %813 = vmatpush.msra.mxu0 0.0
    %814 = vmatpush.msra.mxu0 0.0
    %815 = vmatpush.msra.mxu0 0.0
    %816 = vmatpush.msra.mxu0 0.0
    %817 = vmatpush.msra.mxu0 0.0
    %818 = vmatpush.msra.mxu0 %v799
    %819 = vmatpush.msra.mxu0 %v798
    %820 = vmatpush.msra.mxu0 %v797
    %821 = vmatpush.msra.mxu0 %v796
    %822 = vmatmul.f32.gmra.mxu0 %v801
    %v823 = vpop.f32.mrf.mxu0
    %v824 = vadd.f32 0.0, %v823
    %825 = vmatmul.f32.gmra.mxu0 %v804
    %v826 = vpop.f32.mrf.mxu0
    %v827 = vadd.f32 0.0, %v826
    %828 = vdwg.mxu0
    %v829 = vadd.f32 %v90, %v92
    %v830 = vadd.f32 %v91, %v93
    %v831 = vadd.f32 %v829, %v824
    %v832 = vadd.f32 %v830, %v827
    %v833 = vld [vmem:[%s9] sm:$0x1]
    %v834 = vld [vmem:[%s10] sm:$0x1]
    %v835 = vsel %vm101, %v831, 0.0
    %836 = vadd.xlane.f32.xlu0 %v835
    %v837 = vpop.xlane.xlu0 %836
    %v838 = vsel %vm101, %v832, 0.0
    %839 = vadd.xlane.f32.xlu0 %v838
    %v840 = vpop.xlane.xlu0 %839
    %v841 = vrcp.pop 32.0
    %v842 = vmul.f32 32.0, %v841
    %v843 = vsub.f32 1.0, %v842
    %v844 = vmul.f32 %v841, %v843
    %v845 = vadd.f32 %v841, %v844
    %vm846 = vweird.f32 %v841
    %v847 = vsel %vm846, %v841, %v845
    %v848 = vmul.f32 %v837, %v847
    %v849 = vmul.f32 %v840, %v847
    %v850 = vsub.f32 %v831, %v848
    %v851 = vsub.f32 %v832, %v849
    %v852 = vmul.f32 %v850, %v850
    %v853 = vmul.f32 %v851, %v851
    %v854 = vsel %vm101, %v852, 0.0
    %855 = vadd.xlane.f32.xlu0 %v854
    %v856 = vpop.xlane.xlu0 %855
    %v857 = vsel %vm101, %v853, 0.0
    %858 = vadd.xlane.f32.xlu0 %v857
    %v859 = vpop.xlane.xlu0 %858
    %v860 = vmul.f32 %v856, %v847
    %v861 = vmul.f32 %v859, %v847
    %v862 = vadd.f32 %v860, 1e-05
    %v863 = vadd.f32 %v861, 1e-05
    %v864 = vrsqrt.pop %v862
    %v865 = vmul.f32 %v864, %v862
    %v866 = vmul.f32 %v865, %v864
    %v867 = vmul.f32 0.5, %v866
    %v868 = vsub.f32 1.5, %v867
    %v869 = vmul.f32 %v864, %v868
    %vm870 = vweird.f32 %v862
    %vm871 = vweird.f32 %v864
    %vm872 = vmor %vm870, %vm871
    %v873 = vsel %vm872, %v864, %v869
    %v874 = vrsqrt.pop %v863
    %v875 = vmul.f32 %v874, %v863
    %v876 = vmul.f32 %v875, %v874
    %v877 = vmul.f32 0.5, %v876
    %v878 = vsub.f32 1.5, %v877
    %v879 = vmul.f32 %v874, %v878
    %vm880 = vweird.f32 %v863
    %vm881 = vweird.f32 %v874
    %vm882 = vmor %vm880, %vm881
    %v883 = vsel %vm882, %v874, %v879
    %v884 = vmul.f32 %v850, %v873
    %v885 = vmul.f32 %v851, %v883
    %v887 = vperm.slane %v833, 0
    %v889 = vmul.f32 %v884, %v887
    %v890 = vmul.f32 %v885, %v887
    %v892 = vperm.slane %v834, 0
    %v894 = vadd.f32 %v889, %v892
    %v895 = vadd.f32 %v890, %v892
    %v896 = vld [vmem:[%s5] sm:$0xff]
    %v897 = vld [vmem:[%s5 + $0x8] sm:$0xff]
    %v898 = vld [vmem:[%s5 + $0x10] sm:$0xff]
    %v899 = vld [vmem:[%s5 + $0x18] sm:$0xff]
    %v900 = vld [vmem:[%s6] sm:$0x1]
    %v902 = vperm.slane %v900, 0
    %v905 = vsel %vm101, %v894, 0
    %v908 = vsel %vm101, %v895, 0
    %910 = vmatpush.msra.mxu0 0.0
    %911 = vmatpush.msra.mxu0 0.0
    %912 = vmatpush.msra.mxu0 0.0
    %913 = vmatpush.msra.mxu0 0.0
    %914 = vmatpush.msra.mxu0 0.0
    %915 = vmatpush.msra.mxu0 0.0
    %916 = vmatpush.msra.mxu0 0.0
    %917 = vmatpush.msra.mxu0 0.0
    %918 = vmatpush.msra.mxu0 0.0
    %919 = vmatpush.msra.mxu0 0.0
    %920 = vmatpush.msra.mxu0 0.0
    %921 = vmatpush.msra.mxu0 0.0
    %922 = vmatpush.msra.mxu0 %v899
    %923 = vmatpush.msra.mxu0 %v898
    %924 = vmatpush.msra.mxu0 %v897
    %925 = vmatpush.msra.mxu0 %v896
    %926 = vmatmul.f32.gmra.mxu0 %v905
    %v927 = vpop.f32.mrf.mxu0
    %v928 = vadd.f32 %v902, %v927
    %929 = vmatmul.f32.gmra.mxu0 %v908
    %v930 = vpop.f32.mrf.mxu0
    %v931 = vadd.f32 %v902, %v930
    %932 = vdwg.mxu0
    %v933 = vmax.f32 %v928, 0.0
    %v934 = vmax.f32 %v931, 0.0
    %v935 = vld [vmem:[%s7] sm:$0xff]
    %v936 = vld [vmem:[%s7 + $0x8] sm:$0xff]
    %v937 = vld [vmem:[%s7 + $0x10] sm:$0xff]
    %v938 = vld [vmem:[%s7 + $0x18] sm:$0xff]
    %v939 = vld [vmem:[%s7 + $0x20] sm:$0xff]
    %v940 = vld [vmem:[%s7 + $0x28] sm:$0xff]
    %v941 = vld [vmem:[%s7 + $0x30] sm:$0xff]
    %v942 = vld [vmem:[%s7 + $0x38] sm:$0xff]
    %v943 = vld [vmem:[%s8] sm:$0x1]
    %v945 = vperm.slane %v943, 0
    %vm947 = vcmask 523264
    %v949 = vsel %vm947, %v933, 0
    %v952 = vsel %vm947, %v934, 0
    %954 = vmatpush.msra.mxu0 0.0
    %955 = vmatpush.msra.mxu0 0.0
    %956 = vmatpush.msra.mxu0 0.0
    %957 = vmatpush.msra.mxu0 0.0
    %958 = vmatpush.msra.mxu0 0.0
    %959 = vmatpush.msra.mxu0 0.0
    %960 = vmatpush.msra.mxu0 0.0
    %961 = vmatpush.msra.mxu0 0.0
    %962 = vmatpush.msra.mxu0 %v942
    %963 = vmatpush.msra.mxu0 %v941
    %964 = vmatpush.msra.mxu0 %v940
    %965 = vmatpush.msra.mxu0 %v939
    %966 = vmatpush.msra.mxu0 %v938
    %967 = vmatpush.msra.mxu0 %v937
    %968 = vmatpush.msra.mxu0 %v936
    %969 = vmatpush.msra.mxu0 %v935
    %970 = vmatmul.f32.gmra.mxu0 %v949
    %v971 = vpop.f32.mrf.mxu0
    %v972 = vadd.f32 %v945, %v971
    %973 = vmatmul.f32.gmra.mxu0 %v952
    %v974 = vpop.f32.mrf.mxu0
    %v975 = vadd.f32 %v945, %v974
    %976 = vdwg.mxu0
    %v977 = vadd.f32 %v894, %v92
    %v978 = vadd.f32 %v895, %v93
    %v979 = vadd.f32 %v977, %v972
    %v980 = vadd.f32 %v978, %v975
    %v981 = vld [vmem:[%s11] sm:$0x1]
    %v982 = vld [vmem:[%s12] sm:$0x1]
    %v983 = vsel %vm101, %v979, 0.0
    %984 = vadd.xlane.f32.xlu0 %v983
    %v985 = vpop.xlane.xlu0 %984
    %v986 = vsel %vm101, %v980, 0.0
    %987 = vadd.xlane.f32.xlu0 %v986
    %v988 = vpop.xlane.xlu0 %987
    %v989 = vmul.f32 %v985, %v847
    %v990 = vmul.f32 %v988, %v847
    %v991 = vsub.f32 %v979, %v989
    %v992 = vsub.f32 %v980, %v990
    %v993 = vmul.f32 %v991, %v991
    %v994 = vmul.f32 %v992, %v992
    %v995 = vsel %vm101, %v993, 0.0
    %996 = vadd.xlane.f32.xlu0 %v995
    %v997 = vpop.xlane.xlu0 %996
    %v998 = vsel %vm101, %v994, 0.0
    %999 = vadd.xlane.f32.xlu0 %v998
    %v1000 = vpop.xlane.xlu0 %999
    %v1001 = vmul.f32 %v997, %v847
    %v1002 = vmul.f32 %v1000, %v847
    %v1003 = vadd.f32 %v1001, 1e-05
    %v1004 = vadd.f32 %v1002, 1e-05
    %v1005 = vrsqrt.pop %v1003
    %v1006 = vmul.f32 %v1005, %v1003
    %v1007 = vmul.f32 %v1006, %v1005
    %v1008 = vmul.f32 0.5, %v1007
    %v1009 = vsub.f32 1.5, %v1008
    %v1010 = vmul.f32 %v1005, %v1009
    %vm1011 = vweird.f32 %v1003
    %vm1012 = vweird.f32 %v1005
    %vm1013 = vmor %vm1011, %vm1012
    %v1014 = vsel %vm1013, %v1005, %v1010
    %v1015 = vrsqrt.pop %v1004
    %v1016 = vmul.f32 %v1015, %v1004
    %v1017 = vmul.f32 %v1016, %v1015
    %v1018 = vmul.f32 0.5, %v1017
    %v1019 = vsub.f32 1.5, %v1018
    %v1020 = vmul.f32 %v1015, %v1019
    %vm1021 = vweird.f32 %v1004
    %vm1022 = vweird.f32 %v1015
    %vm1023 = vmor %vm1021, %vm1022
    %v1024 = vsel %vm1023, %v1015, %v1020
    %v1025 = vmul.f32 %v991, %v1014
    %v1026 = vmul.f32 %v992, %v1024
    %v1028 = vperm.slane %v981, 0
    %v1030 = vmul.f32 %v1025, %v1028
    %v1031 = vmul.f32 %v1026, %v1028
    %v1033 = vperm.slane %v982, 0
    %v1035 = vadd.f32 %v1030, %v1033
    %v1036 = vadd.f32 %v1031, %v1033
    %1037 = vst.msk [vmem:[#allocation8] sm:$0xff] %vm101, %v1035
    %1038 = vst.msk [vmem:[#allocation8 + $0x8] sm:$0xff] %vm101, %v1036
    // Predicated region
    $region66: #{tpu_custom_call.1} parent=1 // pred_check
      _
    $region67: #{tpu_custom_call.1} parent=1 // pred_check_branch
      %1040 = sbr.rel (0) target = $region69
    $region68: #{tpu_custom_call.1} parent=1 // pred_region
      %1042 = vsyncadd [#allocation4], 0
      %s1043 = sshll.u32 [#allocation8], 4
      %s1044 = int_to_ptr.vmem [resolvable:$true] %s1043
      %s1045 = sshll.u32 %s13, 4
      %s1046 = int_to_ptr.hbm [resolvable:$true] %s1045
      %1051 = dma.vmem_to_hbm [thread:$0]  %s1044, 256, %s1046, [#allocation4], 128, 128, 8
    $region69: #{tpu_custom_call.1} parent=1 // pred_fallthru
      _
    // Predicated region
    $region70: #{tpu_custom_call.1} parent=1 // pred_check
      _
    $region71: #{tpu_custom_call.1} parent=1 // pred_check_branch
      %1053 = sbr.rel (0) target = $region73
    $region72: #{tpu_custom_call.1} parent=1 // pred_region
      %1055 = dma.done [#allocation4], 256
    $region73: #{tpu_custom_call.1} parent=1 // pred_fallthru
      _
    %1056 = vsyncpa [#allocation3], 1
    %1057 = vsyncpa [#allocation6], 1
    %1058 = vsyncpa [#allocation4], 1

</llo_original>
